<compile_context>
chip_gen: v6e
topology: v6e:2x2x1
jax: 0.10.0
libtpu: 0.0.40
codegen_flags: <defaults>
</compile_context>

<pallas_src>
import functools

import jax
import jax.numpy as jnp
from jax import lax
from jax.experimental import pallas as pl
from jax.experimental.pallas import tpu as pltpu

_NEG_LARGE = -1e30  # softmax mask value (avoids inf-inf NaNs in online update)


def _round_up(x: int, m: int) -> int:
    return (x + m - 1) // m * m


def _cdiv(a: int, b: int) -> int:
    return (a + b - 1) // b


def _in_batch_neg_loss_kernel(q_ref, d_ref, out_ref, m_sc, l_sc, diag_sc,
                              *, actual_b: int, tile_q: int, tile_kv: int,
                              needs_mask: bool):
    qi = pl.program_id(0)          # query-tile index  ("parallel")
    kv = pl.program_id(1)          # doc-tile index    ("arbitrary" / reduction)
    nk = pl.num_programs(1)

    # --- init online-softmax accumulators at the start of each doc sweep ----
    @pl.when(kv == 0)
    def _init():
        m_sc[...] = jnp.full_like(m_sc, _NEG_LARGE)
        l_sc[...] = jnp.zeros_like(l_sc)
        diag_sc[...] = jnp.zeros_like(diag_sc)

    q = q_ref[...]                 # [tile_q, Dm]  (native dtype)
    d = d_ref[...]                 # [tile_kv, Dm] (native dtype)

    # --- similarity tile on the MXU (contract last dims, f32 accumulate) ----
    sim = lax.dot_general(
        q, d,
        dimension_numbers=(((1,), (1,)), ((), ())),   # Q @ D^T without a transpose
        preferred_element_type=jnp.float32,
    )                                                 # [tile_q, tile_kv] f32

    # --- mask padded doc columns (static no-op when B is tile_kv-aligned) ---
    if needs_mask:
        col = kv * tile_kv + lax.broadcasted_iota(jnp.int32, sim.shape, 1)
        sim = jnp.where(col < actual_b, sim, _NEG_LARGE)

    # --- online logsumexp update --------------------------------------------
    m_prev = m_sc[...]                                             # [tile_q, 1]
    m_new = jnp.maximum(m_prev, jnp.max(sim, axis=-1, keepdims=True))
    alpha = jnp.exp(m_prev - m_new)
    p = jnp.exp(sim - m_new)
    l_sc[...] = alpha * l_sc[...] + jnp.sum(p, axis=-1, keepdims=True)
    m_sc[...] = m_new

    # --- diagonal (positive-pair logit) extracted from the sim tile ---------
    # Only tiles whose global row/col ranges overlap can contain diagonal
    # entries; with tile_q != tile_kv the diagonal spans several kv tiles, so
    # accumulate the (at most one per row per tile) contributions.
    q_lo = qi * tile_q
    kv_lo = kv * tile_kv
    overlaps = jnp.logical_and(kv_lo < q_lo + tile_q, q_lo < kv_lo + tile_kv)

    @pl.when(overlaps)
    def _diag():
        row = q_lo + lax.broadcasted_iota(jnp.int32, sim.shape, 0)
        col = kv_lo + lax.broadcasted_iota(jnp.int32, sim.shape, 1)
        diag_sc[...] += jnp.sum(jnp.where(row == col, sim, 0.0),
                                axis=-1, keepdims=True)            # [tile_q, 1]

    # --- finalize: per-row (logsumexp - diag) -------------------------------
    @pl.when(kv == nk - 1)
    def _finalize():
        out_ref[...] = m_sc[...] + jnp.log(l_sc[...]) - diag_sc[...]


def in_batch_negative_loss(query_vectors: jax.Array,
                           doc_vectors: jax.Array,
                           *,
                           max_tile_q: int = 512,
                           max_tile_kv: int = 256,
                           cast_to_bf16: bool = False) -> jax.Array:
    """query_vectors, doc_vectors: [batch, dim]. Returns scalar f32 loss."""
    assert query_vectors.shape == doc_vectors.shape
    b, dm = query_vectors.shape

    q, d = query_vectors, doc_vectors
    if cast_to_bf16:
        # Optional: halves HBM traffic and multiplies MXU throughput; changes
        # numerics vs. the f32 reference, so off by default.
        q = q.astype(jnp.bfloat16)
        d = d.astype(jnp.bfloat16)

    b8 = _round_up(b, 8)

    # Doc tile: MXU-native width (256 on v6e/v7x; compiler splits on v5e).
    tile_kv = min(max_tile_kv, b8)

    # Query tile: large (fewer full re-streams of D from HBM), but keep at
    # least 2 q-tiles when the batch allows so the "parallel" axis can shard
    # across both TensorCores on v7x.  Small batches get a single exact tile
    # (sublane dim only needs a multiple of 8 -> no quadratic padding waste).
    if b8 <= 256:
        tile_q = b8
    else:
        tile_q = min(max_tile_q, _round_up(_cdiv(b8, 2), 8))

    # --- generation-aware VMEM budget ---------------------------------------
    try:
        vmem_cap = int(pltpu.get_tpu_info().vmem_capacity_bytes)
    except Exception:
        vmem_cap = 64 << 20          # conservative fallback (v7x per-TC VMEM)

    itemsize = jnp.dtype(q.dtype).itemsize

    def _vmem_need(tq: int, tkv: int) -> int:
        return (2 * tq * dm * itemsize        # q tile, double-buffered
                + 2 * tkv * dm * itemsize     # d tile, double-buffered
                + 6 * tq * tkv * 4            # sim tile + elementwise temps (f32)
                + 4 * tq * 128 * 4)           # m/l/diag scratch + out (lane-padded)

    budget = int(0.6 * vmem_cap)
    while _vmem_need(tile_q, tile_kv) > budget and tile_q > 64:
        tile_q = max(64, _round_up(tile_q // 2, 8))
    while _vmem_need(tile_q, tile_kv) > budget and tile_kv > 128:
        tile_kv = max(128, _round_up(tile_kv // 2, 8))

    n_q = _cdiv(b, tile_q)
    n_kv = _cdiv(b, tile_kv)
    needs_mask = (n_kv * tile_kv) != b

    vmem_limit = int(min(max(_vmem_need(tile_q, tile_kv) + (8 << 20), 32 << 20),
                         int(0.75 * vmem_cap)))

    kernel = functools.partial(
        _in_batch_neg_loss_kernel,
        actual_b=b, tile_q=tile_q, tile_kv=tile_kv, needs_mask=needs_mask)

    # No wrapper-side padding: partial final blocks use Pallas implicit
    # padding (reads of the pad region are garbage but masked/dropped; writes
    # to the partial output block are masked by Pallas).
    per_row = pl.pallas_call(
        kernel,
        out_shape=jax.ShapeDtypeStruct((b, 1), jnp.float32),
        grid_spec=pltpu.PrefetchScalarGridSpec(
            num_scalar_prefetch=0,
            grid=(n_q, n_kv),
            in_specs=[
                pl.BlockSpec((tile_q, dm), lambda qi, kv: (qi, 0)),   # query tile
                pl.BlockSpec((tile_kv, dm), lambda qi, kv: (kv, 0)),  # doc tile
            ],
            out_specs=pl.BlockSpec((tile_q, 1), lambda qi, kv: (qi, 0)),
            scratch_shapes=[
                pltpu.VMEM((tile_q, 1), jnp.float32),   # m_i (running max)
                pltpu.VMEM((tile_q, 1), jnp.float32),   # l_i (running sum)
                pltpu.VMEM((tile_q, 1), jnp.float32),   # diag (positive logit)
            ],
        ),
        compiler_params=pltpu.CompilerParams(
            dimension_semantics=("parallel", "arbitrary"),
            vmem_limit_bytes=vmem_limit,
        ),
    )(q, d)

    # Mean over the B rows -- tiny reduction, done in XLA.
    return jnp.sum(per_row) / b


def _reference_loss(q, d):
    sim = q.astype(jnp.float32) @ d.astype(jnp.float32).T
    n = sim.shape[0]
    logp = jax.nn.log_softmax(sim, axis=-1)
    return -jnp.mean(logp[jnp.arange(n), jnp.arange(n)])


if __name__ == "__main__":
    key = jax.random.PRNGKey(0)

    # Small case from the module spec (batch=8, dim=32): single tile.
    kq, kd, key = jax.random.split(key, 3)
    batch, dim = 8, 32
    query_vectors = jax.random.normal(kq, (batch, dim), dtype=jnp.float32)
    doc_vectors = jax.random.normal(kd, (batch, dim), dtype=jnp.float32)

    loss = in_batch_negative_loss(query_vectors, doc_vectors)
    jax.block_until_ready(loss)
    ref = _reference_loss(query_vectors, doc_vectors)
    assert jnp.allclose(loss, ref, rtol=1e-4, atol=5e-4), (loss, ref)

    # Mid-sized non-128-aligned batch: exact tile_q/tile_kv = 200 (multiple of
    # 8) -> no padding waste, no mask, single grid step.
    kq2, kd2, key = jax.random.split(key, 3)
    batch2, dim2 = 200, 64
    q2 = jax.random.normal(kq2, (batch2, dim2), dtype=jnp.float32)
    d2 = jax.random.normal(kd2, (batch2, dim2), dtype=jnp.float32)

    loss2 = in_batch_negative_loss(q2, d2)
    jax.block_until_ready(loss2)
    ref2 = _reference_loss(q2, d2)
    assert jnp.allclose(loss2, ref2, rtol=1e-4, atol=5e-4), (loss2, ref2)

    # Larger non-tile-multiple case: exercises decoupled tile_q/tile_kv,
    # multi-tile grid, online logsumexp, implicit partial-block padding,
    # padded-column masking, and diag accumulation across doc tiles.
    kq3, kd3 = jax.random.split(key)
    batch3, dim3 = 300, 48
    q3 = jax.random.normal(kq3, (batch3, dim3), dtype=jnp.float32)
    d3 = jax.random.normal(kd3, (batch3, dim3), dtype=jnp.float32)

    loss3 = in_batch_negative_loss(q3, d3)
    jax.block_until_ready(loss3)
    ref3 = _reference_loss(q3, d3)
    assert jnp.allclose(loss3, ref3, rtol=1e-4, atol=5e-4), (loss3, ref3)

    print("KERNEL_OK")
</pallas_src>

<mosaic_0001>
module attributes {stable_mosaic.version = 11 : i64} {
  func.func @_in_batch_neg_loss_kernel(%arg0: i32, %arg1: i32, %arg2: memref<8x32xf32, #tpu.memory_space<vmem>>, %arg3: memref<8x32xf32, #tpu.memory_space<vmem>>, %arg4: memref<8x1xf32, #tpu.memory_space<vmem>>, %arg5: memref<8x1xf32, #tpu.memory_space<vmem>>, %arg6: memref<8x1xf32, #tpu.memory_space<vmem>>, %arg7: memref<8x1xf32, #tpu.memory_space<vmem>>) attributes {dimension_semantics = [#tpu.dimension_semantics<parallel>, #tpu.dimension_semantics<arbitrary>], iteration_bounds = array<i64: 1, 1>, scalar_prefetch = 0 : i64, scratch_operands = 3 : i64, tpu.core_type = #tpu.core_type<tc>, window_params = [{transform_indices = @transform_0, window_bounds = array<i64: 8, 32>}, {transform_indices = @transform_1, window_bounds = array<i64: 8, 32>}, {transform_indices = @transform_2, window_bounds = array<i64: 8, 1>}]} {
    %c0_i32 = arith.constant 0 : i32
    %0 = arith.cmpi eq, %arg1, %c0_i32 : i32
    %1 = arith.extui %0 : i1 to i32
    %c0_i32_0 = arith.constant 0 : i32
    %2 = arith.cmpi ne, %1, %c0_i32_0 : i32
    scf.if %2 {
      %cst_20 = arith.constant -1.000000e+30 : f32
      %34 = vector.broadcast %cst_20 : f32 to vector<8x1xf32>
      %c0_21 = arith.constant 0 : index
      %c0_22 = arith.constant 0 : index
      %35 = vector.load %arg5[%c0_21, %c0_22] : memref<8x1xf32, #tpu.memory_space<vmem>>, vector<8x1xf32>
      tpu.vector_store %arg5[%c0_21, %c0_22], %34 {strides = array<i32>} : memref<8x1xf32, #tpu.memory_space<vmem>>, vector<8x1xf32>,
      %cst_23 = arith.constant 0.000000e+00 : f32
      %36 = vector.broadcast %cst_23 : f32 to vector<8x1xf32>
      %c0_24 = arith.constant 0 : index
      %c0_25 = arith.constant 0 : index
      %37 = vector.load %arg6[%c0_24, %c0_25] : memref<8x1xf32, #tpu.memory_space<vmem>>, vector<8x1xf32>
      tpu.vector_store %arg6[%c0_24, %c0_25], %36 {strides = array<i32>} : memref<8x1xf32, #tpu.memory_space<vmem>>, vector<8x1xf32>,
      %cst_26 = arith.constant 0.000000e+00 : f32
      %38 = vector.broadcast %cst_26 : f32 to vector<8x1xf32>
      %c0_27 = arith.constant 0 : index
      %c0_28 = arith.constant 0 : index
      %39 = vector.load %arg7[%c0_27, %c0_28] : memref<8x1xf32, #tpu.memory_space<vmem>>, vector<8x1xf32>
      tpu.vector_store %arg7[%c0_27, %c0_28], %38 {strides = array<i32>} : memref<8x1xf32, #tpu.memory_space<vmem>>, vector<8x1xf32>,
    } else {
    }
    %c0 = arith.constant 0 : index
    %c0_1 = arith.constant 0 : index
    %3 = vector.load %arg2[%c0, %c0_1] : memref<8x32xf32, #tpu.memory_space<vmem>>, vector<8x32xf32>
    %c0_2 = arith.constant 0 : index
    %c0_3 = arith.constant 0 : index
    %4 = vector.load %arg3[%c0_2, %c0_3] : memref<8x32xf32, #tpu.memory_space<vmem>>, vector<8x32xf32>
    %cst = arith.constant dense<0.000000e+00> : vector<8x8xf32>
    %5 = tpu.matmul %3, %4, %cst {dimension_numbers = #tpu.dot_dimension_numbers<[1], [1], [0], [0], [0, 0, 1, 0], [], []>} : vector<8x32xf32>, vector<8x32xf32>, vector<8x8xf32> -> vector<8x8xf32>
    %c0_4 = arith.constant 0 : index
    %c0_5 = arith.constant 0 : index
    %6 = vector.load %arg5[%c0_4, %c0_5] : memref<8x1xf32, #tpu.memory_space<vmem>>, vector<8x1xf32>
    %cst_6 = arith.constant dense<0xFF800000> : vector<8xf32>
    %7 = vector.multi_reduction <maximumf>, %5, %cst_6 [1] : vector<8x8xf32> to vector<8xf32>
    %8 = vector.shape_cast %7 : vector<8xf32> to vector<8x1xf32>
    %9 = arith.maximumf %6, %8 : vector<8x1xf32>
    %10 = arith.subf %6, %9 : vector<8x1xf32>
    %11 = math.exp %10 : vector<8x1xf32>
    %12 = vector.broadcast %9 : vector<8x1xf32> to vector<8x8xf32>
    %13 = arith.subf %5, %12 : vector<8x8xf32>
    %14 = math.exp %13 : vector<8x8xf32>
    %c0_7 = arith.constant 0 : index
    %c0_8 = arith.constant 0 : index
    %15 = vector.load %arg6[%c0_7, %c0_8] : memref<8x1xf32, #tpu.memory_space<vmem>>, vector<8x1xf32>
    %16 = arith.mulf %11, %15 : vector<8x1xf32>
    %cst_9 = arith.constant dense<0.000000e+00> : vector<8xf32>
    %17 = vector.multi_reduction <add>, %14, %cst_9 [1] : vector<8x8xf32> to vector<8xf32>
    %18 = vector.shape_cast %17 : vector<8xf32> to vector<8x1xf32>
    %19 = arith.addf %16, %18 : vector<8x1xf32>
    %c0_10 = arith.constant 0 : index
    %c0_11 = arith.constant 0 : index
    %20 = vector.load %arg6[%c0_10, %c0_11] : memref<8x1xf32, #tpu.memory_space<vmem>>, vector<8x1xf32>
    tpu.vector_store %arg6[%c0_10, %c0_11], %19 {strides = array<i32>} : memref<8x1xf32, #tpu.memory_space<vmem>>, vector<8x1xf32>,
    %c0_12 = arith.constant 0 : index
    %c0_13 = arith.constant 0 : index
    %21 = vector.load %arg5[%c0_12, %c0_13] : memref<8x1xf32, #tpu.memory_space<vmem>>, vector<8x1xf32>
    tpu.vector_store %arg5[%c0_12, %c0_13], %9 {strides = array<i32>} : memref<8x1xf32, #tpu.memory_space<vmem>>, vector<8x1xf32>,
    %c8_i32 = arith.constant 8 : i32
    %22 = arith.muli %arg0, %c8_i32 : i32
    %c8_i32_14 = arith.constant 8 : i32
    %23 = arith.muli %arg1, %c8_i32_14 : i32
    %c8_i32_15 = arith.constant 8 : i32
    %24 = arith.addi %22, %c8_i32_15 : i32
    %25 = arith.cmpi slt, %23, %24 : i32
    %c8_i32_16 = arith.constant 8 : i32
    %26 = arith.addi %23, %c8_i32_16 : i32
    %27 = arith.cmpi slt, %22, %26 : i32
    %28 = arith.andi %25, %27 : i1
    %29 = arith.extui %28 : i1 to i32
    %c0_i32_17 = arith.constant 0 : i32
    %30 = arith.cmpi ne, %29, %c0_i32_17 : i32
    scf.if %30 {
      %34 = tpu.iota {dimensions = array<i32: 0>} : vector<8x8xi32>
      %35 = vector.broadcast %22 : i32 to vector<8x8xi32>
      %36 = arith.addi %35, %34 : vector<8x8xi32>
      %37 = tpu.iota {dimensions = array<i32: 1>} : vector<8x8xi32>
      %38 = vector.broadcast %23 : i32 to vector<8x8xi32>
      %39 = arith.addi %38, %37 : vector<8x8xi32>
      %c0_20 = arith.constant 0 : index
      %c0_21 = arith.constant 0 : index
      %40 = vector.load %arg7[%c0_20, %c0_21] : memref<8x1xf32, #tpu.memory_space<vmem>>, vector<8x1xf32>
      %41 = arith.cmpi eq, %36, %39 : vector<8x8xi32>
      %cst_22 = arith.constant 0.000000e+00 : f32
      %42 = vector.broadcast %cst_22 : f32 to vector<8x8xf32>
      %43 = arith.select %41, %5, %42 : vector<8x8xi1>, vector<8x8xf32>
      %cst_23 = arith.constant dense<0.000000e+00> : vector<8xf32>
      %44 = vector.multi_reduction <add>, %43, %cst_23 [1] : vector<8x8xf32> to vector<8xf32>
      %45 = vector.shape_cast %44 : vector<8xf32> to vector<8x1xf32>
      %46 = arith.addf %40, %45 : vector<8x1xf32>
      %c0_24 = arith.constant 0 : index
      %c0_25 = arith.constant 0 : index
      %47 = vector.load %arg7[%c0_24, %c0_25] : memref<8x1xf32, #tpu.memory_space<vmem>>, vector<8x1xf32>
      tpu.vector_store %arg7[%c0_24, %c0_25], %46 {strides = array<i32>} : memref<8x1xf32, #tpu.memory_space<vmem>>, vector<8x1xf32>,
    } else {
    }
    %c0_i32_18 = arith.constant 0 : i32
    %31 = arith.cmpi eq, %arg1, %c0_i32_18 : i32
    %32 = arith.extui %31 : i1 to i32
    %c0_i32_19 = arith.constant 0 : i32
    %33 = arith.cmpi ne, %32, %c0_i32_19 : i32
    scf.if %33 {
      %c0_20 = arith.constant 0 : index
      %c0_21 = arith.constant 0 : index
      %34 = vector.load %arg5[%c0_20, %c0_21] : memref<8x1xf32, #tpu.memory_space<vmem>>, vector<8x1xf32>
      %c0_22 = arith.constant 0 : index
      %c0_23 = arith.constant 0 : index
      %35 = vector.load %arg6[%c0_22, %c0_23] : memref<8x1xf32, #tpu.memory_space<vmem>>, vector<8x1xf32>
      %36 = math.log %35 : vector<8x1xf32>
      %37 = arith.addf %34, %36 : vector<8x1xf32>
      %c0_24 = arith.constant 0 : index
      %c0_25 = arith.constant 0 : index
      %38 = vector.load %arg7[%c0_24, %c0_25] : memref<8x1xf32, #tpu.memory_space<vmem>>, vector<8x1xf32>
      %39 = arith.subf %37, %38 : vector<8x1xf32>
      %c0_26 = arith.constant 0 : index
      %c0_27 = arith.constant 0 : index
      %40 = vector.load %arg4[%c0_26, %c0_27] : memref<8x1xf32, #tpu.memory_space<vmem>>, vector<8x1xf32>
      tpu.vector_store %arg4[%c0_26, %c0_27], %39 {strides = array<i32>} : memref<8x1xf32, #tpu.memory_space<vmem>>, vector<8x1xf32>,
    } else {
    }
    return
  }
  func.func @transform_0(%arg0: i32, %arg1: i32) -> (i32, i32) {
    %c0_i32 = arith.constant 0 : i32
    %c0_i32_0 = arith.constant 0 : i32
    return %arg0, %c0_i32 : i32, i32
  }
  func.func @transform_1(%arg0: i32, %arg1: i32) -> (i32, i32) {
    %c0_i32 = arith.constant 0 : i32
    %c0_i32_0 = arith.constant 0 : i32
    return %arg1, %c0_i32 : i32, i32
  }
  func.func @transform_2(%arg0: i32, %arg1: i32) -> (i32, i32) {
    %c0_i32 = arith.constant 0 : i32
    %c0_i32_0 = arith.constant 0 : i32
    return %arg0, %c0_i32 : i32, i32
  }
}

</mosaic_0001>

<llo_original>
// kernel: tpu_custom_call.1
$region0: #{tpu_custom_call.1}
  #allocation0 [shape = 'u32[]', space=smem, size = 0x4, offset = 0x4, fixed_abs, tag = 'smem constant byte address 0x4 - core index']
  #allocation1 [shape = 'u32[144,128]{1,0:T(1,128)}', space=vmem, size = 0x12000, scoped, tag = 'internal scratch']
  #allocation2 [shape = 'f32[8,1]{1,0:T(8,128)}', space=vmem, size = 0x1000, scoped, tag = 'scratch operand']
  #allocation3 [shape = 'f32[8,1]{1,0:T(8,128)}', space=vmem, size = 0x1000, scoped, tag = 'scratch operand']
  #allocation4 [shape = 'f32[8,1]{1,0:T(8,128)}', space=vmem, size = 0x1000, scoped, tag = 'scratch operand']
  %s0 = inlined_call_operand.hbm [shape: f32[8,32], index: 0, kind: input, shape index: {}]
  %s1 = inlined_call_operand.hbm [shape: f32[8,32], index: 1, kind: input, shape index: {}]
  %s2 = inlined_call_operand.vmem [shape: f32[8,1], index: 2, kind: output, shape index: {}]
  %s3 = sld [smem:[#allocation0]]
  $region38: #{tpu_custom_call.1} parent=0
    _
  %s5 = ssub.s32 1, %s3
  %s6 = scalar_select 0, %s5, %s3
  $region1: #{tpu_custom_call.1} parent=0
    #allocation5 [shape = 'u8[4096]{0}', space=vmem, size = 0x1000, scoped, tag = 'input window, operand 0, single buffered']
    #allocation6 [shape = 's32[1]{0}', space=sflag, size = 0x4, scoped, tag = 'scoped memory for tpu_custom_call.1']
    #allocation7 [shape = 'u8[4096]{0}', space=vmem, size = 0x1000, scoped, tag = 'input window, operand 1, single buffered']
    #allocation8 [shape = 's32[1]{0}', space=sflag, size = 0x4, scoped, tag = 'scoped memory for tpu_custom_call.1']
    %7 = vsyncpa [#allocation6], 0
    %8 = vsyncpa [#allocation8], 0
    // Predicated region
    $region2: #{tpu_custom_call.1} parent=1 // pred_check
      _
    $region3: #{tpu_custom_call.1} parent=1 // pred_check_branch
      %10 = sbr.rel (0) target = $region5
    $region4: #{tpu_custom_call.1} parent=1 // pred_region
      %s12 = ssub.s32 128, 128
      %13 = vsyncadd [#allocation6], %s12
      %s15 = sshll.u32 [#allocation5], 4
      %s16 = int_to_ptr.vmem [resolvable:$true] %s15
      %18 = dma.hbm_to_vmem [thread:$0]  %s0, 128, %s16, [#allocation6]
    $region5: #{tpu_custom_call.1} parent=1 // pred_fallthru
      _
    // Predicated region
    $region6: #{tpu_custom_call.1} parent=1 // pred_check
      _
    $region7: #{tpu_custom_call.1} parent=1 // pred_check_branch
      %20 = sbr.rel (0) target = $region9
    $region8: #{tpu_custom_call.1} parent=1 // pred_region
      %s22 = ssub.s32 128, 128
      %23 = vsyncadd [#allocation8], %s22
      %s25 = sshll.u32 [#allocation7], 4
      %s26 = int_to_ptr.vmem [resolvable:$true] %s25
      %28 = dma.hbm_to_vmem [thread:$0]  %s1, 128, %s26, [#allocation8]
    $region9: #{tpu_custom_call.1} parent=1 // pred_fallthru
      _
    // Predicated region
    $region10: #{tpu_custom_call.1} parent=1 // pred_check
      _
    $region11: #{tpu_custom_call.1} parent=1 // pred_check_branch
      %30 = sbr.rel (0) target = $region13
    $region12: #{tpu_custom_call.1} parent=1 // pred_region
      %31 = dma.done [#allocation6], 128
    $region13: #{tpu_custom_call.1} parent=1 // pred_fallthru
      _
    // Predicated region
    $region14: #{tpu_custom_call.1} parent=1 // pred_check
      _
    $region15: #{tpu_custom_call.1} parent=1 // pred_check_branch
      %33 = sbr.rel (0) target = $region17
    $region16: #{tpu_custom_call.1} parent=1 // pred_region
      %34 = dma.done [#allocation8], 128
    $region17: #{tpu_custom_call.1} parent=1 // pred_fallthru
      _
    %p35 = scmp.eq.s32.totalorder 0, 0
    // Predicated region
    $region18: #{tpu_custom_call.1} parent=1 // pred_check
      %p36 = pneg %p35
    $region19: #{tpu_custom_call.1} parent=1 // pred_check_branch
      %38 = sbr.rel (%p36) target = $region21
    $region20: #{tpu_custom_call.1} parent=1 // pred_region
      %vm39 = vcmask 7168
      %40 = vst.msk [vmem:[#allocation2] sm:$0xff] %vm39, -1e+30
      %41 = vst.msk [vmem:[#allocation3] sm:$0xff] %vm39, 0.0
      %42 = vst.msk [vmem:[#allocation4] sm:$0xff] %vm39, 0.0
    $region21: #{tpu_custom_call.1} parent=1 // pred_fallthru
      _
    %v43 = vld [vmem:[#allocation5] sm:$0xff]
    %v44 = vld [vmem:[#allocation7] sm:$0xff]
    %vm45 = vcmask 261120
    %v47 = vsel %vm45, %v43, 0
    %v50 = vsel %vm45, %v44, 0
    %52 = vmatprep.subr.mxu0 0.0
    %53 = vmatpush1.xpose.msra.mxu0 0.0
    %54 = vmatprep.subr.mxu0 0.0
    %55 = vmatpush1.xpose.msra.mxu0 0.0
    %56 = vmatprep.subr.mxu0 0.0
    %57 = vmatpush1.xpose.msra.mxu0 0.0
    %58 = vmatprep.subr.mxu0 0.0
    %59 = vmatpush1.xpose.msra.mxu0 0.0
    %60 = vmatprep.subr.mxu0 0.0
    %61 = vmatpush1.xpose.msra.mxu0 0.0
    %62 = vmatprep.subr.mxu0 0.0
    %63 = vmatpush1.xpose.msra.mxu0 0.0
    %64 = vmatprep.subr.mxu0 0.0
    %65 = vmatpush1.xpose.msra.mxu0 0.0
    %66 = vmatprep.subr.mxu0 0.0
    %67 = vmatpush1.xpose.msra.mxu0 0.0
    %68 = vmatprep.subr.mxu0 0.0
    %69 = vmatpush1.xpose.msra.mxu0 0.0
    %70 = vmatprep.subr.mxu0 0.0
    %71 = vmatpush1.xpose.msra.mxu0 0.0
    %72 = vmatprep.subr.mxu0 0.0
    %73 = vmatpush1.xpose.msra.mxu0 0.0
    %74 = vmatprep.subr.mxu0 0.0
    %75 = vmatpush1.xpose.msra.mxu0 0.0
    %76 = vmatprep.subr.mxu0 0.0
    %77 = vmatpush1.xpose.msra.mxu0 0.0
    %78 = vmatprep.subr.mxu0 0.0
    %79 = vmatpush1.xpose.msra.mxu0 0.0
    %80 = vmatprep.subr.mxu0 0.0
    %81 = vmatpush1.xpose.msra.mxu0 0.0
    %82 = vmatprep.subr.mxu0 0.0
    %83 = vmatpush1.xpose.msra.mxu0 %v50
    %84 = vmatprep.subr.mxu0 0.0
    %85 = vmatpush2.xpose.msra.mxu0 0.0
    %86 = vmatprep.subr.mxu0 0.0
    %87 = vmatpush2.xpose.msra.mxu0 0.0
    %88 = vmatprep.subr.mxu0 0.0
    %89 = vmatpush2.xpose.msra.mxu0 0.0
    %90 = vmatprep.subr.mxu0 0.0
    %91 = vmatpush2.xpose.msra.mxu0 0.0
    %92 = vmatprep.subr.mxu0 0.0
    %93 = vmatpush2.xpose.msra.mxu0 0.0
    %94 = vmatprep.subr.mxu0 0.0
    %95 = vmatpush2.xpose.msra.mxu0 0.0
    %96 = vmatprep.subr.mxu0 0.0
    %97 = vmatpush2.xpose.msra.mxu0 0.0
    %98 = vmatprep.subr.mxu0 0.0
    %99 = vmatpush2.xpose.msra.mxu0 0.0
    %100 = vmatprep.subr.mxu0 0.0
    %101 = vmatpush2.xpose.msra.mxu0 0.0
    %102 = vmatprep.subr.mxu0 0.0
    %103 = vmatpush2.xpose.msra.mxu0 0.0
    %104 = vmatprep.subr.mxu0 0.0
    %105 = vmatpush2.xpose.msra.mxu0 0.0
    %106 = vmatprep.subr.mxu0 0.0
    %107 = vmatpush2.xpose.msra.mxu0 0.0
    %108 = vmatprep.subr.mxu0 0.0
    %109 = vmatpush2.xpose.msra.mxu0 0.0
    %110 = vmatprep.subr.mxu0 0.0
    %111 = vmatpush2.xpose.msra.mxu0 0.0
    %112 = vmatprep.subr.mxu0 0.0
    %113 = vmatpush2.xpose.msra.mxu0 0.0
    %114 = vmatprep.subr.mxu0 0.0
    %115 = vmatpush2.xpose.msra.mxu0 0.0
    %116 = vmatprep.mubr.f32.mxu0 0.0
    %117 = vmatmul.mubr.f32.gmra.mxu0 %v47
    %v118 = vpop.f32.mrf.mxu0
    %v119 = vadd.f32 0.0, %v118
    %v120 = vpop.f32.mrf.mxu0
    %121 = vdwg.mxu0
    %v122 = vld [vmem:[#allocation2] sm:$0xff]
    %vm123 = vcmask 64512
    %v124 = vsel %vm123, %v119, -inf
    %125 = vmax.xlane.f32.xlu0 %v124
    %v126 = vpop.xlane.xlu0 %125
    %v127 = vmax.f32 %v122, %v126
    %v128 = vsub.f32 %v122, %v127
    %v129 = vmul.f32 %v128, 1.442695
    %v130 = vpow.pop %v129
    %132 = vset.pattern.permute.xlu0 0
    %133 = vperm.xlu0 %132, %v127
    %v134 = vpop.permute.xlu0 %133
    %v136 = vsub.f32 %v119, %v134
    %v137 = vmul.f32 %v136, 1.442695
    %v138 = vpow.pop %v137
    %v139 = vld [vmem:[#allocation3] sm:$0xff]
    %v140 = vmul.f32 %v130, %v139
    %v141 = vsel %vm123, %v138, 0.0
    %142 = vadd.xlane.f32.xlu0 %v141
    %v143 = vpop.xlane.xlu0 %142
    %v144 = vadd.f32 %v140, %v143
    %vm145 = vcmask 7168
    %146 = vst.msk [vmem:[#allocation3] sm:$0xff] %vm145, %v144
    %147 = vst.msk [vmem:[#allocation2] sm:$0xff] %vm145, %v127
    %s148 = smul.u32 0, 8
    %s149 = smul.u32 0, 8
    %s150 = sadd.s32 %s148, 8
    %p151 = scmp.lt.s32.totalorder %s149, %s150
    %s152 = sadd.s32 %s149, 8
    %p153 = scmp.lt.s32.totalorder %s148, %s152
    %p154 = pnand %p151, %p153
    %p155 = pneg %p154
    // Predicated region
    $region22: #{tpu_custom_call.1} parent=1 // pred_check
      _
    $region23: #{tpu_custom_call.1} parent=1 // pred_check_branch
      %157 = sbr.rel (%p154) target = $region25
    $region24: #{tpu_custom_call.1} parent=1 // pred_region
      %v158 = vlaneseq
      %v159 = vshrl.u32 %v158, 7
      %v160 = vstv %s148
      %v161 = vadd.s32 %v160, %v159
      %v162 = vlaneseq
      %v163 = vand.u32 %v162, 127
      %v164 = vstv %s149
      %v165 = vadd.s32 %v164, %v163
      %v166 = vld [vmem:[#allocation4] sm:$0xff]
      %vm167 = vcmp.eq.s32.totalorder %v161, %v165
      %v168 = vsel %vm167, %v119, 0.0
      %v169 = vsel %vm123, %v168, 0.0
      %170 = vadd.xlane.f32.xlu0 %v169
      %v171 = vpop.xlane.xlu0 %170
      %v172 = vadd.f32 %v166, %v171
      %173 = vst.msk [vmem:[#allocation4] sm:$0xff] %vm145, %v172
    $region25: #{tpu_custom_call.1} parent=1 // pred_fallthru
      _
    // Predicated region
    $region26: #{tpu_custom_call.1} parent=1 // pred_check
      %p174 = pneg %p35
    $region27: #{tpu_custom_call.1} parent=1 // pred_check_branch
      %176 = sbr.rel (%p174) target = $region29
    $region28: #{tpu_custom_call.1} parent=1 // pred_region
      %v177 = vld [vmem:[#allocation2] sm:$0xff]
      %v178 = vld [vmem:[#allocation3] sm:$0xff]
      %v179 = vlog2.pop %v178
      %v180 = vmul.f32 %v179, 0.6931472
      %v181 = vadd.f32 %v177, %v180
      %v182 = vld [vmem:[#allocation4] sm:$0xff]
      %v183 = vsub.f32 %v181, %v182
      %184 = vst.msk [vmem:[%s2] sm:$0xff] %vm145, %v183
    $region29: #{tpu_custom_call.1} parent=1 // pred_fallthru
      _
    // Predicated region
    $region30: #{tpu_custom_call.1} parent=1 // pred_check
      _
    $region31: #{tpu_custom_call.1} parent=1 // pred_check_branch
      %186 = sbr.rel (0) target = $region33
    $region32: #{tpu_custom_call.1} parent=1 // pred_region
      _
    $region33: #{tpu_custom_call.1} parent=1 // pred_fallthru
      _
    // Predicated region
    $region34: #{tpu_custom_call.1} parent=1 // pred_check
      _
    $region35: #{tpu_custom_call.1} parent=1 // pred_check_branch
      %188 = sbr.rel (0) target = $region37
    $region36: #{tpu_custom_call.1} parent=1 // pred_region
      _
    $region37: #{tpu_custom_call.1} parent=1 // pred_fallthru
      _
    %189 = vsyncpa [#allocation6], 1
    %190 = vsyncpa [#allocation8], 1

</llo_original>
